<compile_context>
chip_gen: v6e
topology: v6e:2x2x1
jax: 0.10.0
libtpu: 0.0.40
codegen_flags: <defaults>
</compile_context>

<pallas_src>
import functools
import math

import jax
import jax.numpy as jnp
from jax.experimental import pallas as pl
from jax.experimental.pallas import tpu as pltpu


def make_sinusoidal_pe(max_len: int, model_dim: int, dtype=jnp.float32):
    """Deterministic buffer construction (mirrors the PyTorch __init__)."""
    position = jnp.arange(0, max_len, dtype=jnp.float32)[:, None]            # (L, 1)
    div_term = jnp.exp(
        jnp.arange(0, model_dim, 2, dtype=jnp.float32)
        * (-math.log(10000.0) / model_dim)
    )                                                                         # (D/2,)
    pe = jnp.zeros((max_len, model_dim), dtype=jnp.float32)
    pe = pe.at[:, 0::2].set(jnp.sin(position * div_term))
    pe = pe.at[:, 1::2].set(jnp.cos(position * div_term))
    return pe.astype(dtype)


# ----------------------------- kernels ------------------------------------- #

def _pe_add_kernel(x_ref, pe_ref, o_ref):
    # x_ref: (B_tile, R_tile, 128); pe_ref: (R_tile, 128) broadcast over batch.
    o_ref[...] = (x_ref[...] + pe_ref[...][None, :, :]).astype(o_ref.dtype)


def _pe_add_dropout_prng_kernel(seed_ref, x_ref, pe_ref, o_ref, *, dropout_p):
    # TPU-only path: mask comes from the in-kernel hardware PRNG (no HBM stream).
    y = x_ref[...] + pe_ref[...][None, :, :]
    r = pl.program_id(0)
    b = pl.program_id(1)
    pltpu.prng_seed(seed_ref[0] + r * pl.num_programs(1) + b)
    bits = pltpu.prng_random_bits(y.shape)
    # Integer-threshold Bernoulli: keep with probability (1 - p). Threshold is
    # computed at trace time in whichever signedness the PRNG bits surface as.
    if jnp.issubdtype(bits.dtype, jnp.signedinteger):
        thr = int(round(dropout_p * 2.0 ** 32)) - 2 ** 31
        thr = max(min(thr, 2 ** 31 - 1), -(2 ** 31))
    else:
        thr = min(int(round(dropout_p * 2.0 ** 32)), 2 ** 32 - 1)
    keep = bits >= jnp.asarray(thr, dtype=bits.dtype)
    o_ref[...] = jnp.where(keep, y * (1.0 / (1.0 - dropout_p)), 0.0).astype(o_ref.dtype)


def _pe_add_dropout_bits_kernel(x_ref, pe_ref, bits_ref, o_ref, *, dropout_p):
    # Portable path: uint32 random bits streamed in as a regular tiled input.
    y = x_ref[...] + pe_ref[...][None, :, :]
    thr = min(int(round(dropout_p * 2.0 ** 32)), 2 ** 32 - 1)
    keep = bits_ref[...] >= jnp.uint32(thr)
    o_ref[...] = jnp.where(keep, y * (1.0 / (1.0 - dropout_p)), 0.0).astype(o_ref.dtype)


# --------------------------- tiling helpers --------------------------------- #

def _sublane_multiple(itemsize: int) -> int:
    # f32 -> 8, bf16 -> 16, int8/fp8 -> 32 (native packed tile heights).
    return {4: 8, 2: 16, 1: 32}.get(itemsize, 8)


def _device_budget():
    """Return (x_tile_target_bytes, vmem_limit_bytes) for the local device."""
    try:
        dev = jax.devices()[0]
    except Exception:  # pragma: no cover - no devices at all
        return 4 << 20, None
    if dev.platform != "tpu":
        return 4 << 20, None
    kind = (getattr(dev, "device_kind", "") or "").lower()
    if "v7" in kind:
        # 64 MiB VMEM/TC: double-buffered 8 MiB x + 8 MiB out + PE ~ 36 MiB.
        return 8 << 20, 40 << 20
    if "v6" in kind:
        return 4 << 20, 64 << 20
    if "v5" in kind:
        # Keeps the footprint under v5e's 16 MiB scoped default even without the
        # explicit limit, but raise the limit anyway for headroom.
        return 3 << 20, 64 << 20
    return 4 << 20, 64 << 20


def _pick_tiles(batch: int, rows: int, itemsize: int, target_bytes: int,
                max_rows: int = 2048):
    """Fixed near-target tile sizes; the grid uses pl.cdiv so no divisor search."""
    sub = _sublane_multiple(itemsize)
    if rows <= max_rows:
        r_tile = rows                      # full extent: always layout-legal
    else:
        r_tile = max_rows - (max_rows % sub)   # sublane-aligned, ragged edge masked
    per_batch = max(r_tile * 128 * itemsize, 1)
    b_tile = int(max(1, min(batch, target_bytes // per_batch)))
    return b_tile, r_tile


def _on_tpu() -> bool:
    try:
        return jax.devices()[0].platform == "tpu"
    except Exception:
        return False


# ------------------------------ wrapper ------------------------------------- #

def positional_encoding(x, pe_table, *, dropout_p=0.1, training=False, seed=0):
    """x: (B, S, D); pe_table: (max_len, D). Returns (B, S, D)."""
    B, S, D = x.shape
    assert pe_table.shape[0] >= S and pe_table.shape[1] == D

    apply_dropout = bool(training) and float(dropout_p) > 0.0
    if apply_dropout and float(dropout_p) >= 1.0:
        # nn.Dropout(p=1) zeroes everything; avoids 1/(1-p) division by zero.
        return jnp.zeros_like(x)

    # Pre-cast PE to x.dtype (no per-step convert, fewer HBM bytes if x is bf16).
    pe_slice = pe_table[:S].astype(x.dtype)

    # Lane-dense layout: fold (S, D) into rows of 128 lanes. Pad S*D up to a
    # multiple of 128 if needed so every store is a full-width unmasked vst.
    n = S * D
    n_pad = (-n) % 128
    if n_pad:
        xf = jnp.pad(x.reshape(B, n), ((0, 0), (0, n_pad)))
        pef = jnp.pad(pe_slice.reshape(n), (0, n_pad))
    else:
        xf = x.reshape(B, n)
        pef = pe_slice.reshape(n)
    L = 128
    R = (n + n_pad) // L
    x3 = xf.reshape(B, R, L)
    pe2 = pef.reshape(R, L)

    itemsize = jnp.dtype(x.dtype).itemsize
    target_bytes, vmem_limit = _device_budget()
    B_tile, R_tile = _pick_tiles(B, R, itemsize, target_bytes)

    # Row axis OUTER so the PE block index only changes along the outer axis:
    # the PE slab streams from HBM exactly once for the whole grid.
    grid = (pl.cdiv(R, R_tile), pl.cdiv(B, B_tile))

    x_spec = pl.BlockSpec((B_tile, R_tile, L), lambda r, b: (b, r, 0))
    pe_spec = pl.BlockSpec((R_tile, L), lambda r, b: (r, 0))
    out_spec = pl.BlockSpec((B_tile, R_tile, L), lambda r, b: (b, r, 0))

    compiler_params = pltpu.CompilerParams(
        # Disjoint output tiles on both axes (no accumulation) -> parallel, so the
        # two v7x TensorCores can shard the grid.
        dimension_semantics=("parallel", "parallel"),
        vmem_limit_bytes=vmem_limit,
    )
    stream_bytes = 2 * x3.size * itemsize + pe2.size * itemsize
    out_shape = jax.ShapeDtypeStruct(x3.shape, x.dtype)

    if not apply_dropout:
        out = pl.pallas_call(
            _pe_add_kernel,
            out_shape=out_shape,
            grid=grid,
            in_specs=[x_spec, pe_spec],
            out_specs=out_spec,
            compiler_params=compiler_params,
            cost_estimate=pl.CostEstimate(
                flops=x3.size, transcendentals=0, bytes_accessed=stream_bytes),
        )(x3, pe2)
    elif _on_tpu():
        # In-kernel TPU hardware PRNG: no extra HBM stream for the dropout mask.
        seed_arr = jnp.array([seed], dtype=jnp.int32)
        kernel = functools.partial(_pe_add_dropout_prng_kernel,
                                   dropout_p=float(dropout_p))
        out = pl.pallas_call(
            kernel,
            out_shape=out_shape,
            grid_spec=pltpu.PrefetchScalarGridSpec(
                num_scalar_prefetch=1,  # seed lives in SMEM
                grid=grid,
                in_specs=[
                    pl.BlockSpec((B_tile, R_tile, L), lambda r, b, seed: (b, r, 0)),
                    pl.BlockSpec((R_tile, L), lambda r, b, seed: (r, 0)),
                ],
                out_specs=pl.BlockSpec((B_tile, R_tile, L),
                                       lambda r, b, seed: (b, r, 0)),
            ),
            compiler_params=compiler_params,
            cost_estimate=pl.CostEstimate(
                flops=3 * x3.size, transcendentals=0, bytes_accessed=stream_bytes),
        )(seed_arr, x3, pe2)
    else:
        # Portable fallback (CPU / interpret sandboxes): random bits generated in
        # the wrapper and streamed into the kernel as a regular tiled input.
        # TODO(synk): dropout RNG stream cannot match torch's bit-for-bit.
        bits = jax.random.bits(jax.random.PRNGKey(seed), x3.shape, dtype=jnp.uint32)
        bits_spec = pl.BlockSpec((B_tile, R_tile, L), lambda r, b: (b, r, 0))
        kernel = functools.partial(_pe_add_dropout_bits_kernel,
                                   dropout_p=float(dropout_p))
        out = pl.pallas_call(
            kernel,
            out_shape=out_shape,
            grid=grid,
            in_specs=[x_spec, pe_spec, bits_spec],
            out_specs=out_spec,
            compiler_params=compiler_params,
            cost_estimate=pl.CostEstimate(
                flops=3 * x3.size, transcendentals=0,
                bytes_accessed=stream_bytes + bits.size * 4),
        )(x3, pe2, bits)

    out2 = out.reshape(B, R * L)
    if n_pad:
        out2 = out2[:, :n]
    return out2.reshape(B, S, D)


# ------------------------------- demo --------------------------------------- #

if __name__ == "__main__":
    # Small shapes consistent with the module's forward: (batch, seq, model_dim)
    B, S, D = 2, 8, 32
    MAX_LEN = 64
    P = 0.1

    key = jax.random.PRNGKey(0)
    x = jax.random.normal(key, (B, S, D), dtype=jnp.float32)
    pe = make_sinusoidal_pe(MAX_LEN, D)
    ref = x + pe[None, :S, :]

    # Eval mode (dropout is identity) -- matches module.eval() forward exactly.
    y_eval = positional_encoding(x, pe, dropout_p=P, training=False)
    y_eval = jax.block_until_ready(y_eval)
    assert y_eval.shape == (B, S, D)
    assert y_eval.dtype == x.dtype
    assert jnp.allclose(y_eval, ref, atol=1e-6), "mismatch vs reference add"

    # Training mode exercises the dropout path (TPU PRNG on hardware, streamed
    # bits elsewhere).
    y_train = positional_encoding(x, pe, dropout_p=P, training=True, seed=42)
    y_train = jax.block_until_ready(y_train)
    assert y_train.shape == (B, S, D)
    # Inverted-dropout consistency: every surviving element equals ref / (1 - p).
    scale = 1.0 / (1.0 - P)
    expected = jnp.where(y_train != 0, ref * scale, 0.0)
    assert jnp.allclose(y_train, expected, atol=1e-5), "dropout scaling mismatch"

    print("KERNEL_OK")
</pallas_src>

<mosaic_0001>
module attributes {stable_mosaic.version = 11 : i64} {
  func.func @_pe_add_kernel(%arg0: i32, %arg1: i32, %arg2: memref<2x2x128xf32, #tpu.memory_space<vmem>>, %arg3: memref<2x128xf32, #tpu.memory_space<vmem>>, %arg4: memref<2x2x128xf32, #tpu.memory_space<vmem>>) attributes {dimension_semantics = [#tpu.dimension_semantics<parallel>, #tpu.dimension_semantics<parallel>], iteration_bounds = array<i64: 1, 1>, scalar_prefetch = 0 : i64, scratch_operands = 0 : i64, tpu.core_type = #tpu.core_type<tc>, window_params = [{transform_indices = @transform_0, window_bounds = array<i64: 2, 2, 128>}, {transform_indices = @transform_1, window_bounds = array<i64: 2, 128>}, {transform_indices = @transform_2, window_bounds = array<i64: 2, 2, 128>}]} {
    %c0 = arith.constant 0 : index
    %c0_0 = arith.constant 0 : index
    %c0_1 = arith.constant 0 : index
    %0 = vector.load %arg2[%c0, %c0_0, %c0_1] : memref<2x2x128xf32, #tpu.memory_space<vmem>>, vector<2x2x128xf32>
    %c0_2 = arith.constant 0 : index
    %c0_3 = arith.constant 0 : index
    %1 = vector.load %arg3[%c0_2, %c0_3] : memref<2x128xf32, #tpu.memory_space<vmem>>, vector<2x128xf32>
    %2 = vector.shape_cast %1 : vector<2x128xf32> to vector<1x2x128xf32>
    %3 = vector.broadcast %2 : vector<1x2x128xf32> to vector<2x2x128xf32>
    %4 = arith.addf %0, %3 : vector<2x2x128xf32>
    %c0_4 = arith.constant 0 : index
    %c0_5 = arith.constant 0 : index
    %c0_6 = arith.constant 0 : index
    %5 = vector.load %arg4[%c0_4, %c0_5, %c0_6] : memref<2x2x128xf32, #tpu.memory_space<vmem>>, vector<2x2x128xf32>
    tpu.vector_store %arg4[%c0_4, %c0_5, %c0_6], %4 {strides = array<i32>} : memref<2x2x128xf32, #tpu.memory_space<vmem>>, vector<2x2x128xf32>,
    return
  }
  func.func @transform_0(%arg0: i32, %arg1: i32) -> (i32, i32, i32) {
    %c0_i32 = arith.constant 0 : i32
    %c0_i32_0 = arith.constant 0 : i32
    return %arg1, %arg0, %c0_i32 : i32, i32, i32
  }
  func.func @transform_1(%arg0: i32, %arg1: i32) -> (i32, i32) {
    %c0_i32 = arith.constant 0 : i32
    %c0_i32_0 = arith.constant 0 : i32
    return %arg0, %c0_i32 : i32, i32
  }
  func.func @transform_2(%arg0: i32, %arg1: i32) -> (i32, i32, i32) {
    %c0_i32 = arith.constant 0 : i32
    %c0_i32_0 = arith.constant 0 : i32
    return %arg1, %arg0, %c0_i32 : i32, i32, i32
  }
}

</mosaic_0001>

<llo_original>
// kernel: tpu_custom_call.1
$region0: #{tpu_custom_call.1}
  #allocation0 [shape = 'u32[]', space=smem, size = 0x4, offset = 0x4, fixed_abs, tag = 'smem constant byte address 0x4 - core index']
  #allocation1 [shape = 'u32[144,128]{1,0:T(1,128)}', space=vmem, size = 0x12000, scoped, tag = 'internal scratch']
  %s0 = inlined_call_operand.hbm [shape: f32[2,2,128], index: 0, kind: input, shape index: {}]
  %s1 = inlined_call_operand.hbm [shape: f32[2,128], index: 1, kind: input, shape index: {}]
  %s2 = inlined_call_operand.hbm [shape: f32[2,2,128], index: 2, kind: output, shape index: {}]
  %s3 = sld [smem:[#allocation0]]
  $region26: #{tpu_custom_call.1} parent=0
    _
  %s5 = ssub.s32 1, %s3
  %s6 = scalar_select 0, %s5, %s3
  $region1: #{tpu_custom_call.1} parent=0
    #allocation2 [shape = 'u8[2048]{0}', space=vmem, size = 0x800, scoped, tag = 'input window, operand 0, single buffered']
    #allocation3 [shape = 's32[1]{0}', space=sflag, size = 0x4, scoped, tag = 'scoped memory for tpu_custom_call.1']
    #allocation4 [shape = 's32[1]{0}', space=sflag, size = 0x4, scoped, tag = 'scoped memory for tpu_custom_call.1']
    #allocation5 [shape = 'u8[1024]{0}', space=vmem, size = 0x400, scoped, tag = 'input window, operand 1, single buffered']
    #allocation6 [shape = 's32[1]{0}', space=sflag, size = 0x4, scoped, tag = 'scoped memory for tpu_custom_call.1']
    #allocation7 [shape = 'u8[2048]{0}', space=vmem, size = 0x800, scoped, tag = 'output window, operand 0, single buffered']
    %7 = vsyncpa [#allocation3], 0
    %8 = vsyncpa [#allocation6], 0
    %9 = vsyncpa [#allocation4], 0
    // Predicated region
    $region2: #{tpu_custom_call.1} parent=1 // pred_check
      _
    $region3: #{tpu_custom_call.1} parent=1 // pred_check_branch
      %11 = sbr.rel (0) target = $region5
    $region4: #{tpu_custom_call.1} parent=1 // pred_region
      %s13 = ssub.s32 64, 64
      %14 = vsyncadd [#allocation3], %s13
      %s15 = sshll.u32 [#allocation2], 4
      %s16 = int_to_ptr.vmem [resolvable:$true] %s15
      %21 = dma.hbm_to_vmem [thread:$0]  %s0, 64, %s16, [#allocation3], 32, 32, 2
    $region5: #{tpu_custom_call.1} parent=1 // pred_fallthru
      _
    // Predicated region
    $region6: #{tpu_custom_call.1} parent=1 // pred_check
      _
    $region7: #{tpu_custom_call.1} parent=1 // pred_check_branch
      %23 = sbr.rel (0) target = $region9
    $region8: #{tpu_custom_call.1} parent=1 // pred_region
      %s25 = ssub.s32 32, 32
      %26 = vsyncadd [#allocation6], %s25
      %s28 = sshll.u32 [#allocation5], 4
      %s29 = int_to_ptr.vmem [resolvable:$true] %s28
      %31 = dma.hbm_to_vmem [thread:$0]  %s1, 32, %s29, [#allocation6]
    $region9: #{tpu_custom_call.1} parent=1 // pred_fallthru
      _
    // Predicated region
    $region10: #{tpu_custom_call.1} parent=1 // pred_check
      _
    $region11: #{tpu_custom_call.1} parent=1 // pred_check_branch
      %33 = sbr.rel (0) target = $region13
    $region12: #{tpu_custom_call.1} parent=1 // pred_region
      %34 = dma.done [#allocation3], 64
    $region13: #{tpu_custom_call.1} parent=1 // pred_fallthru
      _
    // Predicated region
    $region14: #{tpu_custom_call.1} parent=1 // pred_check
      _
    $region15: #{tpu_custom_call.1} parent=1 // pred_check_branch
      %36 = sbr.rel (0) target = $region17
    $region16: #{tpu_custom_call.1} parent=1 // pred_region
      %37 = dma.done [#allocation6], 32
    $region17: #{tpu_custom_call.1} parent=1 // pred_fallthru
      _
    %v38 = vld [vmem:[#allocation2] sm:$0x3]
    %v39 = vld [vmem:[#allocation2 + $0x2] sm:$0x3]
    %v40 = vld [vmem:[#allocation5] sm:$0x3]
    %v41 = vadd.f32 %v38, %v40
    %v42 = vadd.f32 %v39, %v40
    %43 = vst [vmem:[#allocation7] sm:$0x3] %v41
    %44 = vst [vmem:[#allocation7 + $0x2] sm:$0x3] %v42
    // Predicated region
    $region18: #{tpu_custom_call.1} parent=1 // pred_check
      _
    $region19: #{tpu_custom_call.1} parent=1 // pred_check_branch
      %46 = sbr.rel (0) target = $region21
    $region20: #{tpu_custom_call.1} parent=1 // pred_region
      %s48 = ssub.s32 64, 64
      %49 = vsyncadd [#allocation4], %s48
      %s50 = sshll.u32 [#allocation7], 4
      %s51 = int_to_ptr.vmem [resolvable:$true] %s50
      %56 = dma.vmem_to_hbm [thread:$0]  %s51, 64, %s2, [#allocation4], 32, 32, 2
    $region21: #{tpu_custom_call.1} parent=1 // pred_fallthru
      _
    // Predicated region
    $region22: #{tpu_custom_call.1} parent=1 // pred_check
      _
    $region23: #{tpu_custom_call.1} parent=1 // pred_check_branch
      %58 = sbr.rel (0) target = $region25
    $region24: #{tpu_custom_call.1} parent=1 // pred_region
      %59 = dma.done [#allocation4], 64
    $region25: #{tpu_custom_call.1} parent=1 // pred_fallthru
      _
    %60 = vsyncpa [#allocation3], 1
    %61 = vsyncpa [#allocation6], 1
    %62 = vsyncpa [#allocation4], 1

</llo_original>
